<compile_context>
chip_gen: v5e
topology: v5e:2x2
jax: 0.10.0
libtpu: 0.0.40
codegen_flags: <defaults>
</compile_context>

<pallas_src>
import jax
import jax.numpy as jnp
from jax.experimental import pallas as pl
from jax.experimental.pallas import tpu as pltpu


_LANE = 128       # lane width of a TPU vreg
_MAX_TR = 2048    # max sublane-rows per spatial tile (image block ~3 MiB at C=3)


def _conv_softplus(w_ref, b_ref, img_ref):
    """Synthetic estimate_depth on one (1, C, TR, 128) tile -> (TR, 128) f32."""
    c = img_ref.shape[1]
    acc = jnp.full(img_ref.shape[2:], b_ref[0], dtype=jnp.float32)
    for ci in range(c):  # static, tiny channel loop (C == 3 for BGR): VPU FMA chain
        acc = acc + w_ref[ci] * img_ref[0, ci].astype(jnp.float32)
    # numerically stable softplus -> strictly positive depth (exp/log1p on EUP slot)
    return jnp.maximum(acc, 0.0) + jnp.log1p(jnp.exp(-jnp.abs(acc)))


def _kernel_noscale(w_ref, b_ref, img_ref, out_ref):
    out_ref[0] = _conv_softplus(w_ref, b_ref, img_ref).astype(out_ref.dtype)


def _kernel_global_scale(w_ref, b_ref, s_ref, img_ref, out_ref):
    depth = _conv_softplus(w_ref, b_ref, img_ref)
    # per-image scalar lives in SMEM; no HBM scale stream
    out_ref[0] = (depth * s_ref[pl.program_id(0)]).astype(out_ref.dtype)


def _kernel_spatial_scale(w_ref, b_ref, img_ref, scale_ref, out_ref):
    depth = _conv_softplus(w_ref, b_ref, img_ref)
    out_ref[0] = (depth * scale_ref[0].astype(jnp.float32)).astype(out_ref.dtype)


def depth_model_forward(images, metadata=None, *, weights, bias):
    """JAX/Pallas equivalent of DepthModel.forward.

    images:   (N, C, H, W) float32 (or bf16), BGR in [0, 1]
    metadata: optional dict with key "scales" shaped (1, N, 1, 1) or (1, N, H, W)
    weights:  (C,) synthetic estimate_depth 1x1-conv weights (required)
    bias:     (1,) synthetic estimate_depth bias (required)
    returns:  depth of shape (1, N, H, W), dtype of `images`
    """
    n, c, h, w = images.shape
    out_dtype = images.dtype
    p = h * w

    # Flatten the spatial plane and re-tile as (rows, 128) lanes.
    r = pl.cdiv(p, _LANE)
    if r <= _MAX_TR:
        tr, r_pad = r, r                       # single full-dim spatial tile
    else:
        tr = _MAX_TR                            # multiple of 8 -> valid sublane tile
        r_pad = pl.cdiv(r, tr) * tr
    p_pad = r_pad * _LANE

    img = images.reshape(n, c, p)
    if p_pad != p:
        img = jnp.pad(img, ((0, 0), (0, 0), (0, p_pad - p)))
    img = img.reshape(n, c, r_pad, _LANE)

    w_vec = jnp.asarray(weights, jnp.float32).reshape(c)
    b_vec = jnp.asarray(bias, jnp.float32).reshape(1)

    scales = None
    if metadata is not None and "scales" in metadata and metadata["scales"] is not None:
        scales = metadata["scales"]

    grid = (n, r_pad // tr)
    img_spec = pl.BlockSpec((1, c, tr, _LANE), lambda i, j: (i, 0, j, 0))
    out_spec = pl.BlockSpec((1, tr, _LANE), lambda i, j: (i, j, 0))
    out_shape = jax.ShapeDtypeStruct((n, r_pad, _LANE), out_dtype)
    smem_spec = pl.BlockSpec(memory_space=pltpu.SMEM)

    compiler_params = pltpu.CompilerParams(
        dimension_semantics=("parallel", "parallel"),
        vmem_limit_bytes=32 * 1024 * 1024,
    )

    bytes_img = n * c * p_pad * img.dtype.itemsize
    bytes_out = n * p_pad * jnp.dtype(out_dtype).itemsize

    def _cost(extra_bytes=0):
        return pl.CostEstimate(
            flops=n * p_pad * (2 * c + 4),
            transcendentals=2 * n * p_pad,
            bytes_accessed=bytes_img + bytes_out + extra_bytes,
        )

    if scales is None:
        # No metadata: no scale stream at all (matches PyTorch "skip scale").
        out = pl.pallas_call(
            _kernel_noscale,
            out_shape=out_shape,
            grid=grid,
            in_specs=[smem_spec, smem_spec, img_spec],
            out_specs=out_spec,
            compiler_params=compiler_params,
            cost_estimate=_cost(),
        )(w_vec, b_vec, img)
    elif scales.shape[-2:] == (1, 1):
        # Global per-image scale (1, N, 1, 1): N scalars through SMEM, no HBM stream.
        s_vec = jnp.asarray(scales, jnp.float32).reshape(n)
        out = pl.pallas_call(
            _kernel_global_scale,
            out_shape=out_shape,
            grid=grid,
            in_specs=[smem_spec, smem_spec, smem_spec, img_spec],
            out_specs=out_spec,
            compiler_params=compiler_params,
            cost_estimate=_cost(),
        )(w_vec, b_vec, s_vec, img)
    else:
        # Spatially varying scale (1, N, H, W): stream lane-dense scale tiles.
        s_full = jnp.broadcast_to(scales, (1, n, h, w)).reshape(n, p)
        if p_pad != p:
            s_full = jnp.pad(s_full, ((0, 0), (0, p_pad - p)))
        s_full = s_full.reshape(n, r_pad, _LANE)
        scale_spec = pl.BlockSpec((1, tr, _LANE), lambda i, j: (i, j, 0))
        out = pl.pallas_call(
            _kernel_spatial_scale,
            out_shape=out_shape,
            grid=grid,
            in_specs=[smem_spec, smem_spec, img_spec, scale_spec],
            out_specs=out_spec,
            compiler_params=compiler_params,
            cost_estimate=_cost(extra_bytes=int(s_full.size) * s_full.dtype.itemsize),
        )(w_vec, b_vec, img, s_full)

    depth = out.reshape(n, p_pad)[:, :p].reshape(1, n, h, w)
    return depth


def _reference_forward(images, metadata, weights, bias):
    """Pure-JAX reference of the same semantics."""
    depth = jax.nn.softplus(jnp.einsum("nchw,c->nhw", images, weights) + bias[0])
    depth = depth[None]  # (1, N, H, W)
    if metadata is not None and "scales" in metadata and metadata["scales"] is not None:
        depth = depth * metadata["scales"]
    return depth


if __name__ == "__main__":
    key = jax.random.PRNGKey(0)
    k_img, k_scale = jax.random.split(key)

    N, C, H, W = 2, 3, 16, 16  # small NCHW, BGR channels, values in [0, 1]
    images = jax.random.uniform(k_img, (N, C, H, W), dtype=jnp.float32)

    # deterministic synthetic estimate_depth parameters (1x1 conv over BGR)
    weights = jnp.array([0.2, 0.5, 0.3], dtype=jnp.float32)
    bias = jnp.array([0.1], dtype=jnp.float32)

    # case 1: no metadata -> no scale stream at all
    d0 = depth_model_forward(images, None, weights=weights, bias=bias)

    # case 2: global per-image scale, shape (1, N, 1, 1) -> SMEM scalars
    scales_global = jnp.array([1.5, 0.7], dtype=jnp.float32).reshape(1, N, 1, 1)
    meta_g = {"scales": scales_global}
    d1 = depth_model_forward(images, meta_g, weights=weights, bias=bias)

    # case 3: spatially varying scale, shape (1, N, H, W) -> VMEM tiles
    scales_spatial = 0.5 + jax.random.uniform(k_scale, (1, N, H, W), dtype=jnp.float32)
    meta_s = {"scales": scales_spatial}
    d2 = depth_model_forward(images, meta_s, weights=weights, bias=bias)

    jax.block_until_ready((d0, d1, d2))

    # verify against pure-JAX reference
    r0 = _reference_forward(images, None, weights, bias)
    r1 = _reference_forward(images, meta_g, weights, bias)
    r2 = _reference_forward(images, meta_s, weights, bias)
    assert d0.shape == (1, N, H, W) and d1.shape == (1, N, H, W) and d2.shape == (1, N, H, W)
    assert jnp.allclose(d0, r0, rtol=1e-5, atol=1e-5)
    assert jnp.allclose(d1, r1, rtol=1e-5, atol=1e-5)
    assert jnp.allclose(d2, r2, rtol=1e-5, atol=1e-5)

    print("KERNEL_OK")
</pallas_src>

<mosaic_0001>
module attributes {stable_mosaic.version = 11 : i64} {
  func.func @_kernel_noscale(%arg0: i32, %arg1: i32, %arg2: memref<3xf32, #tpu.memory_space<smem>>, %arg3: memref<1xf32, #tpu.memory_space<smem>>, %arg4: memref<1x3x2x128xf32, #tpu.memory_space<vmem>>, %arg5: memref<1x2x128xf32, #tpu.memory_space<vmem>>) attributes {dimension_semantics = [#tpu.dimension_semantics<parallel>, #tpu.dimension_semantics<parallel>], iteration_bounds = array<i64: 2, 1>, scalar_prefetch = 0 : i64, scratch_operands = 0 : i64, tpu.core_type = #tpu.core_type<tc>, window_params = [{transform_indices = @transform_0, window_bounds = array<i64: 3>}, {transform_indices = @transform_1, window_bounds = array<i64: 1>}, {transform_indices = @transform_2, window_bounds = array<i64: 1, 3, 2, 128>}, {transform_indices = @transform_3, window_bounds = array<i64: 1, 2, 128>}]} {
    %c0 = arith.constant 0 : index
    %0 = memref.load %arg3[%c0] : memref<1xf32, #tpu.memory_space<smem>>
    %1 = vector.broadcast %0 : f32 to vector<2x128xf32>
    %c0_0 = arith.constant 0 : index
    %2 = memref.load %arg2[%c0_0] : memref<3xf32, #tpu.memory_space<smem>>
    %c0_1 = arith.constant 0 : index
    %c0_2 = arith.constant 0 : index
    %c0_3 = arith.constant 0 : index
    %c0_4 = arith.constant 0 : index
    %3 = vector.load %arg4[%c0_1, %c0_2, %c0_3, %c0_4] : memref<1x3x2x128xf32, #tpu.memory_space<vmem>>, vector<1x1x2x128xf32>
    %4 = vector.shape_cast %3 : vector<1x1x2x128xf32> to vector<2x128xf32>
    %5 = vector.broadcast %2 : f32 to vector<2x128xf32>
    %6 = arith.mulf %5, %4 : vector<2x128xf32>
    %7 = arith.addf %1, %6 : vector<2x128xf32>
    %c1 = arith.constant 1 : index
    %8 = memref.load %arg2[%c1] : memref<3xf32, #tpu.memory_space<smem>>
    %c0_5 = arith.constant 0 : index
    %c1_6 = arith.constant 1 : index
    %c0_7 = arith.constant 0 : index
    %c0_8 = arith.constant 0 : index
    %9 = vector.load %arg4[%c0_5, %c1_6, %c0_7, %c0_8] : memref<1x3x2x128xf32, #tpu.memory_space<vmem>>, vector<1x1x2x128xf32>
    %10 = vector.shape_cast %9 : vector<1x1x2x128xf32> to vector<2x128xf32>
    %11 = vector.broadcast %8 : f32 to vector<2x128xf32>
    %12 = arith.mulf %11, %10 : vector<2x128xf32>
    %13 = arith.addf %7, %12 : vector<2x128xf32>
    %c2 = arith.constant 2 : index
    %14 = memref.load %arg2[%c2] : memref<3xf32, #tpu.memory_space<smem>>
    %c0_9 = arith.constant 0 : index
    %c2_10 = arith.constant 2 : index
    %c0_11 = arith.constant 0 : index
    %c0_12 = arith.constant 0 : index
    %15 = vector.load %arg4[%c0_9, %c2_10, %c0_11, %c0_12] : memref<1x3x2x128xf32, #tpu.memory_space<vmem>>, vector<1x1x2x128xf32>
    %16 = vector.shape_cast %15 : vector<1x1x2x128xf32> to vector<2x128xf32>
    %17 = vector.broadcast %14 : f32 to vector<2x128xf32>
    %18 = arith.mulf %17, %16 : vector<2x128xf32>
    %19 = arith.addf %13, %18 : vector<2x128xf32>
    %cst = arith.constant 0.000000e+00 : f32
    %20 = vector.broadcast %cst : f32 to vector<2x128xf32>
    %21 = arith.maximumf %19, %20 : vector<2x128xf32>
    %22 = math.absf %19 : vector<2x128xf32>
    %cst_13 = arith.constant 0.000000e+00 : f32
    %23 = vector.broadcast %cst_13 : f32 to vector<2x128xf32>
    %24 = arith.subf %23, %22 : vector<2x128xf32>
    %25 = math.exp %24 : vector<2x128xf32>
    %26 = math.log1p %25 : vector<2x128xf32>
    %27 = arith.addf %21, %26 : vector<2x128xf32>
    %c0_14 = arith.constant 0 : index
    %c0_15 = arith.constant 0 : index
    %c0_16 = arith.constant 0 : index
    %28 = vector.load %arg5[%c0_14, %c0_15, %c0_16] : memref<1x2x128xf32, #tpu.memory_space<vmem>>, vector<1x2x128xf32>
    %29 = vector.shape_cast %28 : vector<1x2x128xf32> to vector<2x128xf32>
    %30 = vector.shape_cast %27 : vector<2x128xf32> to vector<1x2x128xf32>
    tpu.vector_store %arg5[%c0_14, %c0_15, %c0_16], %30 {strides = array<i32>} : memref<1x2x128xf32, #tpu.memory_space<vmem>>, vector<1x2x128xf32>,
    return
  }
  func.func @transform_0(%arg0: i32, %arg1: i32) -> i32 {
    %c0_i32 = arith.constant 0 : i32
    %c0_i32_0 = arith.constant 0 : i32
    return %c0_i32 : i32
  }
  func.func @transform_1(%arg0: i32, %arg1: i32) -> i32 {
    %c0_i32 = arith.constant 0 : i32
    %c0_i32_0 = arith.constant 0 : i32
    return %c0_i32 : i32
  }
  func.func @transform_2(%arg0: i32, %arg1: i32) -> (i32, i32, i32, i32) {
    %c0_i32 = arith.constant 0 : i32
    %c0_i32_0 = arith.constant 0 : i32
    %c0_i32_1 = arith.constant 0 : i32
    return %arg0, %c0_i32, %arg1, %c0_i32_0 : i32, i32, i32, i32
  }
  func.func @transform_3(%arg0: i32, %arg1: i32) -> (i32, i32, i32) {
    %c0_i32 = arith.constant 0 : i32
    %c0_i32_0 = arith.constant 0 : i32
    return %arg0, %arg1, %c0_i32 : i32, i32, i32
  }
}

</mosaic_0001>

<llo_original>
// kernel: tpu_custom_call.1
$region0: #{tpu_custom_call.1}
  #allocation0 [shape = 'u32[]', space=smem, size = 0x4, offset = 0x4, fixed_abs, tag = 'smem constant byte address 0x4 - core index']
  #allocation1 [shape = 'u32[72,128]{1,0:T(1,128)}', space=vmem, size = 0x9000, scoped, tag = 'internal scratch']
  #allocation2 [shape = 'f32[1]{0:T(128)S(6)}', space=smem, size = 0x200, scoped, tag = 'scoped memory for tpu_custom_call.1']
  %s0 = inlined_call_operand.vmem [shape: f32[3], index: 0, kind: input, shape index: {}]
  %s1 = inlined_call_operand.<no memory space> [shape: f32[1], index: 1, kind: input, shape index: {}]
  %s2 = inlined_call_operand.hbm [shape: f32[2,3,2,128], index: 2, kind: input, shape index: {}]
  %s3 = inlined_call_operand.hbm [shape: f32[2,2,128], index: 3, kind: output, shape index: {}]
  %s4 = sld [smem:[#allocation0]]
  $region53: #{tpu_custom_call.1} parent=0
    _
  %s6 = ssub.s32 1, %s4
  %s7 = scalar_select 0, %s6, %s4
  %8 = sst [smem:[#allocation2]] %s1
  $region1: #{tpu_custom_call.1} parent=0
    #allocation3 [shape = 'u8[512]{0}', space=smem, size = 0x200, scoped, tag = 'input window, operand 0, single buffered']
    #allocation4 [shape = 's32[2]{0}', space=sflag, size = 0x8, scoped, tag = 'scoped memory for tpu_custom_call.1']
    #allocation5 [shape = 's32[2]{0}', space=sflag, size = 0x8, scoped, tag = 'scoped memory for tpu_custom_call.1']
    #allocation6 [shape = 's32[2]{0}', space=sflag, size = 0x8, scoped, tag = 'scoped memory for tpu_custom_call.1']
    #allocation7 [shape = 'u8[6144]{0}', space=vmem, size = 0x1800, scoped, tag = 'input window, operand 2']
    #allocation8 [shape = 'u8[2048]{0}', space=vmem, size = 0x800, scoped, tag = 'output window, operand 0']
    %9 = vsyncpa [#allocation6], 0
    %10 = vsyncpa [#allocation4], 0
    %s11 = scalar_lea.sflag [#allocation4], 1
    %12 = vsyncpa %s11, 0
    %13 = vsyncpa [#allocation5], 0
    %s14 = scalar_lea.sflag [#allocation5], 1
    %15 = vsyncpa %s14, 0
    loop: start=0, step=1, limit=4
    $region2: #{tpu_custom_call.1} parent=1 // loop_pre_header
      _
    $region3: #{tpu_custom_call.1} parent=1 // loop_header
      %s17 = sphi 0, %s21
      %p18 = scmp.ge.s32.totalorder %s17, 4
      %s24 = sphi 0, %s36
      %s25 = sphi 0, %s32
      %s26 = sphi 0, %s24
      %s27 = sphi 0, %s25
      %s28 = sphi 0, %s26
      %s29 = sphi 0, %s27
      %s37 = sphi 0, %s37
      %s39 = sphi 0, %s37
      %s40 = sphi 0, %s39
      %s54 = sphi 0, %s40
      %s58 = sphi 0, %s58
      %s60 = sphi 0, %s58
      %s61 = sphi 0, %s60
      %s75 = sphi 0, %s61
      %s83 = sphi 0, %s85
      %s86 = sphi 0, %s83
      %s87 = sphi 0, %s86
      %s103 = sphi 0, %s87
      %s111 = sphi 0, %s113
      %s114 = sphi 0, %s111
      %s115 = sphi 0, %s114
      %s131 = sphi 0, %s115
    $region4: #{tpu_custom_call.1} parent=1 // loop_header_branch
      %20 = sbr.rel (%p18) target = $region8
    $region5: #{tpu_custom_call.1} parent=1 // loop_body
      %s22 = ssub.s32 %s17, 1
      %s23 = ssub.s32 %s17, 2
      %s30 = sadd.s32 1, %s25
      %p31 = scmp.ge.s32.totalorder %s30, 1
      %s32 = scalar_select %p31, 0, %s30
      %s33 = sadd.s32 1, %s24
      %s34 = scalar_select %p31, %s33, %s24
      %p35 = scmp.ge.s32.totalorder %s34, 2
      %s36 = scalar_select %p35, 0, %s34
      %s38 = sadd.s32 %s37, 1
      %p41 = scmp.eq.s32.totalorder %s17, 1
      %p42 = scmp.ne.s32.totalorder %s37, %s39
      %p43 = scmp.eq.s32.totalorder %s17, 0
      %p44 = por %p42, %p43
      %p45 = scmp.ne.s32.totalorder %s37, %s39
      %p46 = scmp.eq.s32.totalorder %s22, 1
      %p47 = por %p45, %p46
      %p48 = scmp.ne.s32.totalorder %s39, %s40
      %p49 = scmp.eq.s32.totalorder %s22, 0
      %p50 = por %p48, %p49
      %p51 = scmp.ne.s32.totalorder %s39, %s40
      %p52 = scmp.eq.s32.totalorder %s23, 1
      %p53 = por %p51, %p52
      %p55 = scmp.ne.s32.totalorder %s40, %s54
      %p56 = scmp.eq.s32.totalorder %s23, 0
      %p57 = por %p55, %p56
      %s59 = sadd.s32 %s58, 1
      %p62 = scmp.eq.s32.totalorder %s17, 1
      %p63 = scmp.ne.s32.totalorder %s58, %s60
      %p64 = scmp.eq.s32.totalorder %s17, 0
      %p65 = por %p63, %p64
      %p66 = scmp.ne.s32.totalorder %s58, %s60
      %p67 = scmp.eq.s32.totalorder %s22, 1
      %p68 = por %p66, %p67
      %p69 = scmp.ne.s32.totalorder %s60, %s61
      %p70 = scmp.eq.s32.totalorder %s22, 0
      %p71 = por %p69, %p70
      %p72 = scmp.ne.s32.totalorder %s60, %s61
      %p73 = scmp.eq.s32.totalorder %s23, 1
      %p74 = por %p72, %p73
      %p76 = scmp.ne.s32.totalorder %s61, %s75
      %p77 = scmp.eq.s32.totalorder %s23, 0
      %p78 = por %p76, %p77
      %s79 = ssub.s32 %s24, %s36
      %s80 = ssub.s32 %s25, %s32
      %s81 = sor.u32 %s79, %s80
      %p82 = scmp.eq.s32.totalorder %s81, 0
      %s84 = sadd.s32 %s83, 1
      %s85 = scalar_select %p82, %s83, %s84
      %p88 = pneg %p82
      %p89 = scmp.eq.s32.totalorder %s17, 1
      %p90 = por %p88, %p89
      %p91 = scmp.ne.s32.totalorder %s83, %s86
      %p92 = scmp.eq.s32.totalorder %s17, 0
      %p93 = por %p91, %p92
      %p94 = scmp.ne.s32.totalorder %s83, %s86
      %p95 = scmp.eq.s32.totalorder %s22, 1
      %p96 = por %p94, %p95
      %p97 = scmp.ne.s32.totalorder %s86, %s87
      %p98 = scmp.eq.s32.totalorder %s22, 0
      %p99 = por %p97, %p98
      %p100 = scmp.ne.s32.totalorder %s86, %s87
      %p101 = scmp.eq.s32.totalorder %s23, 1
      %p102 = por %p100, %p101
      %p104 = scmp.ne.s32.totalorder %s87, %s103
      %p105 = scmp.eq.s32.totalorder %s23, 0
      %p106 = por %p104, %p105
      %s107 = ssub.s32 %s24, %s36
      %s108 = ssub.s32 %s25, %s32
      %s109 = sor.u32 %s107, %s108
      %p110 = scmp.eq.s32.totalorder %s109, 0
      %s112 = sadd.s32 %s111, 1
      %s113 = scalar_select %p110, %s111, %s112
      %p116 = pneg %p110
      %p117 = scmp.eq.s32.totalorder %s17, 1
      %p118 = por %p116, %p117
      %p119 = scmp.ne.s32.totalorder %s111, %s114
      %p120 = scmp.eq.s32.totalorder %s17, 0
      %p121 = por %p119, %p120
      %p122 = scmp.ne.s32.totalorder %s111, %s114
      %p123 = scmp.eq.s32.totalorder %s22, 1
      %p124 = por %p122, %p123
      %p125 = scmp.ne.s32.totalorder %s114, %s115
      %p126 = scmp.eq.s32.totalorder %s22, 0
      %p127 = por %p125, %p126
      %p128 = scmp.ne.s32.totalorder %s114, %s115
      %p129 = scmp.eq.s32.totalorder %s23, 1
      %p130 = por %p128, %p129
      %p132 = scmp.ne.s32.totalorder %s115, %s131
      %p133 = scmp.eq.s32.totalorder %s23, 0
      %p134 = por %p132, %p133
      %p135 = scmp.le.s32.totalorder 1, %s17
      %p136 = scmp.lt.s32.totalorder %s17, 3
      %p137 = pnand %p135, %p136
      %p138 = pneg %p137
      // Predicated region
      $region9: #{tpu_custom_call.1} parent=5 // pred_check
        _
      $region10: #{tpu_custom_call.1} parent=5 // pred_check_branch
        %140 = sbr.rel (%p137) target = $region12
      $region11: #{tpu_custom_call.1} parent=5 // pred_region
        %s141 = ssub.s32 %s17, 1
        // Predicated region
        $region13: #{tpu_custom_call.1} parent=11 // pred_check
          %p142 = pneg %p50
        $region14: #{tpu_custom_call.1} parent=11 // pred_check_branch
          %144 = sbr.rel (%p142) target = $region16
        $region15: #{tpu_custom_call.1} parent=11 // pred_region
          %146 = vsyncadd [#allocation6], 0
          %s148 = sshll.u32 %s0, 4
          %s149 = int_to_ptr.vmem [resolvable:$true] %s148
          %151 = dma.vmem_to_smem %s149, 16, [#allocation3], [#allocation6]
        $region16: #{tpu_custom_call.1} parent=11 // pred_fallthru
          _
        // Predicated region
        $region17: #{tpu_custom_call.1} parent=11 // pred_check
          %p152 = pneg %p71
        $region18: #{tpu_custom_call.1} parent=11 // pred_check_branch
          %154 = sbr.rel (%p152) target = $region20
        $region19: #{tpu_custom_call.1} parent=11 // pred_region
          _
        $region20: #{tpu_custom_call.1} parent=11 // pred_fallthru
          _
      $region12: #{tpu_custom_call.1} parent=5 // pred_fallthru
        _
      %p155 = scmp.lt.s32.totalorder %s17, 2
      // Predicated region
      $region21: #{tpu_custom_call.1} parent=5 // pred_check
        %p156 = pneg %p155
      $region22: #{tpu_custom_call.1} parent=5 // pred_check_branch
        %158 = sbr.rel (%p156) target = $region24
      $region23: #{tpu_custom_call.1} parent=5 // pred_region
        // Predicated region
        $region25: #{tpu_custom_call.1} parent=23 // pred_check
          %p159 = pneg %p93
        $region26: #{tpu_custom_call.1} parent=23 // pred_check_branch
          %161 = sbr.rel (%p159) target = $region28
        $region27: #{tpu_custom_call.1} parent=23 // pred_region
          %s162 = sand.u32 %s83, 1
          %s163 = scalar_lea.sflag [#allocation4], %s162
          %s164 = sand.u32 %s83, 1
          %s165 = smul.addr %s164, 6
          %s166 = scalar_lea.vmem [#allocation7], %s165
          %168 = vsyncadd %s163, 0
          %s169 = smul.addr %s24, 3
          %s170 = sadd.s32 %s25, %s169
          %s171 = smul.addr %s170, 2
          %s172 = scalar_lea.hbm %s2, %s171
          %s173 = sshll.u32 %s172, 4
          %s174 = int_to_ptr.hbm [resolvable:$true] %s173
          %s175 = sshll.u32 %s166, 4
          %s176 = int_to_ptr.vmem [resolvable:$true] %s175
          %181 = dma.hbm_to_vmem [thread:$0]  %s174, 96, %s176, %s163, 32, 32, 2
        $region28: #{tpu_custom_call.1} parent=23 // pred_fallthru
          _
      $region24: #{tpu_custom_call.1} parent=5 // pred_fallthru
        _
      %p182 = scmp.le.s32.totalorder 1, %s17
      %p183 = scmp.lt.s32.totalorder %s17, 3
      %p184 = pnand %p182, %p183
      %p185 = pneg %p184
      // Predicated region
      $region29: #{tpu_custom_call.1} parent=5 // pred_check
        _
      $region30: #{tpu_custom_call.1} parent=5 // pred_check_branch
        %187 = sbr.rel (%p184) target = $region32
      $region31: #{tpu_custom_call.1} parent=5 // pred_region
        %s188 = ssub.s32 %s17, 1
        // Predicated region
        $region33: #{tpu_custom_call.1} parent=31 // pred_check
          %p189 = pneg %p50
        $region34: #{tpu_custom_call.1} parent=31 // pred_check_branch
          %191 = sbr.rel (%p189) target = $region36
        $region35: #{tpu_custom_call.1} parent=31 // pred_region
          %193 = dma.done [#allocation6], 16
        $region36: #{tpu_custom_call.1} parent=31 // pred_fallthru
          _
        %s194 = sand.u32 %s86, 1
        %s195 = scalar_lea.sflag [#allocation4], %s194
        %s196 = sand.u32 %s86, 1
        %s197 = smul.addr %s196, 6
        %s198 = scalar_lea.vmem [#allocation7], %s197
        // Predicated region
        $region37: #{tpu_custom_call.1} parent=31 // pred_check
          %p199 = pneg %p99
        $region38: #{tpu_custom_call.1} parent=31 // pred_check_branch
          %201 = sbr.rel (%p199) target = $region40
        $region39: #{tpu_custom_call.1} parent=31 // pred_region
          %203 = dma.done %s195, 96
        $region40: #{tpu_custom_call.1} parent=31 // pred_fallthru
          _
        %204 = sfence
        %p205 = pneg %p50
        %p206 = pneg %p47
        %p207 = pneg %p71
        %p208 = pneg %p68
        %s209 = sand.u32 %s86, 1
        %s210 = scalar_lea.sflag [#allocation4], %s209
        %s211 = sand.u32 %s86, 1
        %s212 = smul.addr %s211, 6
        %s213 = scalar_lea.vmem [#allocation7], %s212
        %p214 = pneg %p99
        %p215 = pneg %p96
        %p216 = pneg %p127
        %p217 = pneg %p124
        %s218 = sand.u32 %s114, 1
        %s219 = scalar_lea.sflag [#allocation5], %s218
        %s220 = sand.u32 %s114, 1
        %s221 = smul.addr %s220, 2
        %s222 = scalar_lea.vmem [#allocation8], %s221
        %s223 = sld [smem:[#allocation2]]
        %v224 = vstv %s223
        %s225 = sld [smem:[#allocation3]]
        %v226 = vld [vmem:[%s198] sm:$0x3]
        %v227 = vstv %s225
        %v228 = vmul.f32 %v227, %v226
        %v229 = vadd.f32 %v224, %v228
        %s230 = sld [smem:[#allocation3 + $0x1]]
        %s231 = scalar_lea.vmem %s198, 2 [#allocation7]
        %v232 = vld [vmem:[%s231] sm:$0x3]
        %v233 = vstv %s230
        %v234 = vmul.f32 %v233, %v232
        %v235 = vadd.f32 %v229, %v234
        %s236 = sld [smem:[#allocation3 + $0x2]]
        %s237 = scalar_lea.vmem %s198, 4 [#allocation7]
        %v238 = vld [vmem:[%s237] sm:$0x3]
        %v239 = vstv %s236
        %v240 = vmul.f32 %v239, %v238
        %v241 = vadd.f32 %v235, %v240
        %v242 = vmax.f32 %v241, 0.0
        %v243 = vand.u32 2147483647, %v241
        %v244 = vsub.f32 0.0, %v243
        %v245 = vmul.f32 %v244, 1.442695
        %v246 = vpow.pop %v245
        %v247 = vadd.f32 %v246, 1.0
        %v248 = vlog2.pop %v247
        %v249 = vmul.f32 %v248, 0.6931472
        %v250 = vmul.f32 -0.5, %v246
        %v251 = vadd.f32 %v250, 1.0
        %v252 = vmul.f32 %v251, %v246
        %v253 = vand.u32 2147483647, %v246
        %vm254 = vcmp.lt.f32.partialorder %v253, 0.0004427343
        %v255 = vsel %vm254, %v252, %v249
        %v256 = vadd.f32 %v242, %v255
        %257 = vst [vmem:[%s222] sm:$0x3] %v256
        %s258 = sand.u32 %s114, 1
        %s259 = scalar_lea.sflag [#allocation5], %s258
        %s260 = sand.u32 %s114, 1
        %s261 = smul.addr %s260, 2
        %s262 = scalar_lea.vmem [#allocation8], %s261
        // Predicated region
        $region41: #{tpu_custom_call.1} parent=31 // pred_check
          %p263 = pneg %p124
        $region42: #{tpu_custom_call.1} parent=31 // pred_check_branch
          %265 = sbr.rel (%p263) target = $region44
        $region43: #{tpu_custom_call.1} parent=31 // pred_region
          %267 = vsyncadd %s259, 0
          %s268 = sadd.s32 %s27, %s26
          %s269 = smul.addr %s268, 2
          %s270 = scalar_lea.hbm %s3, %s269
          %s272 = sshll.u32 %s262, 4
          %s273 = int_to_ptr.vmem [resolvable:$true] %s272
          %s274 = sshll.u32 %s270, 4
          %s275 = int_to_ptr.hbm [resolvable:$true] %s274
          %277 = dma.vmem_to_hbm [thread:$0]  %s273, 32, %s275, %s259
        $region44: #{tpu_custom_call.1} parent=31 // pred_fallthru
          _
      $region32: #{tpu_custom_call.1} parent=5 // pred_fallthru
        _
      %p278 = scmp.le.s32.totalorder 2, %s17
      // Predicated region
      $region45: #{tpu_custom_call.1} parent=5 // pred_check
        %p279 = pneg %p278
      $region46: #{tpu_custom_call.1} parent=5 // pred_check_branch
        %281 = sbr.rel (%p279) target = $region48
      $region47: #{tpu_custom_call.1} parent=5 // pred_region
        %s282 = ssub.s32 %s17, 2
        // Predicated region
        $region49: #{tpu_custom_call.1} parent=47 // pred_check
          %p283 = pneg %p130
        $region50: #{tpu_custom_call.1} parent=47 // pred_check_branch
          %285 = sbr.rel (%p283) target = $region52
        $region51: #{tpu_custom_call.1} parent=47 // pred_region
          %s286 = sand.u32 %s115, 1
          %s287 = scalar_lea.sflag [#allocation5], %s286
          %s288 = sand.u32 %s115, 1
          %s289 = smul.addr %s288, 2
          %s290 = scalar_lea.vmem [#allocation8], %s289
          %292 = dma.done %s287, 32
        $region52: #{tpu_custom_call.1} parent=47 // pred_fallthru
          _
      $region48: #{tpu_custom_call.1} parent=5 // pred_fallthru
        _
    $region6: #{tpu_custom_call.1} parent=1 // loop_footer
      %s21 = sadd.s32 1, %s17
    $region7: #{tpu_custom_call.1} parent=1 // loop_footer_branch
      %16 = sbr.rel target = $region3
    $region8: #{tpu_custom_call.1} parent=1 // loop_exit
      _
    %293 = vsyncpa [#allocation4], 1
    %s294 = scalar_lea.sflag [#allocation4], 1
    %295 = vsyncpa %s294, 1
    %296 = vsyncpa [#allocation5], 1
    %s297 = scalar_lea.sflag [#allocation5], 1
    %298 = vsyncpa %s297, 1
    %299 = vsyncpa [#allocation6], 1
    %s300 = scalar_lea.sflag [#allocation6], 1
    %301 = vsyncpa %s300, 1

</llo_original>
